<compile_context>
chip_gen: v6e
topology: v6e:2x2x1
jax: 0.10.0
libtpu: 0.0.40
codegen_flags: <defaults>
</compile_context>

<pallas_src>
import functools

import jax
import jax.numpy as jnp
from jax.experimental import pallas as pl
from jax.experimental.pallas import tpu as pltpu


_FUSED_WEIGHT_LIMIT = 8 * 1024 * 1024     # max bytes for the fused kron weight
_X_ROWBLOCK_LIMIT = 4 * 1024 * 1024       # max bytes for an 8-row x block (fused path)


# ----------------------------------------------------------------------------
# Interpolation-matrix construction (glue, plain JAX, always f32)
# ----------------------------------------------------------------------------
def _interp_matrix(out_size, in_size, mode, align_corners):
    """Matrix M of shape (out_size, in_size) s.t. y = M @ x interpolates 1-D x."""
    out_idx = jnp.arange(out_size, dtype=jnp.float32)

    if mode == "nearest":
        # PyTorch 'nearest': src = floor(dst * in/out); align_corners ignored.
        src = jnp.floor(out_idx * (in_size / out_size))
        src = jnp.clip(src, 0, in_size - 1).astype(jnp.int32)
        return jax.nn.one_hot(src, in_size, dtype=jnp.float32)

    # 'linear' / 'bilinear'
    if align_corners:
        scale = (in_size - 1) / (out_size - 1) if out_size > 1 else 0.0
        src = out_idx * scale
    else:
        src = (out_idx + 0.5) * (in_size / out_size) - 0.5
        src = jnp.clip(src, 0.0, float(in_size - 1))

    i0 = jnp.clip(jnp.floor(src), 0, in_size - 1).astype(jnp.int32)
    i1 = jnp.minimum(i0 + 1, in_size - 1)
    frac = src - i0.astype(jnp.float32)
    return (jax.nn.one_hot(i0, in_size, dtype=jnp.float32) * (1.0 - frac)[:, None]
            + jax.nn.one_hot(i1, in_size, dtype=jnp.float32) * frac[:, None])


# ----------------------------------------------------------------------------
# Tiling / VMEM helpers (static Python, run at trace time)
# ----------------------------------------------------------------------------
def _pick_bm(nc, hw, isz):
    """Rows (planes) per block.  Multiple of 8 that divides NC, ~<=512 KiB block."""
    if nc % 8 != 0:
        return nc                                   # full extent block, no padding
    target = max(8, (512 * 1024) // max(1, hw * isz))
    bm = 8
    while bm * 2 <= min(nc, target) and nc % (bm * 2) == 0:
        bm *= 2
    return bm


def _pick_bn(n_out, hw, wsz):
    """Output-pixel columns per block.  Multiple of 128 dividing n_out, weight
    block <= ~2 MiB, and >= 2 column steps when possible (v7x 2nd TC, pipelining)."""
    if n_out % 128 != 0:
        return n_out                                # full extent block
    cap = max(128, ((2 * 1024 * 1024) // max(1, hw * wsz)) // 128 * 128)
    if n_out >= 256:
        cap = min(cap, n_out // 2)
    best = 128
    bn = 128
    while bn <= min(cap, n_out):
        if n_out % bn == 0:
            best = bn
        bn += 128
    return best


def _vmem_limit_bytes(block_bytes):
    """Generation-aware VMEM limit computed from the actual block footprint."""
    try:
        cap = int(pltpu.get_tpu_info().vmem_capacity_bytes)
    except Exception:
        cap = 64 * 1024 * 1024                      # assume the smallest (v7x per-TC)
    want = int(block_bytes) + (8 << 20)             # blocks + Mosaic scratch headroom
    return int(min(max(want, 16 << 20), cap - (16 << 20)))


# ----------------------------------------------------------------------------
# Fused path: one matmul  (NC, H*W) @ (H*W, H_out*W_out)
# ----------------------------------------------------------------------------
def _interp_fused_kernel(x_ref, w_ref, o_ref):
    # x_ref: (bm, H*W)   planes on sublanes, input pixels on lanes
    # w_ref: (H*W, bn)   column block of kron(Wh, Ww)^T
    # o_ref: (bm, bn)    lane-dense output block
    o_ref[...] = jnp.dot(
        x_ref[...], w_ref[...], preferred_element_type=jnp.float32
    ).astype(o_ref.dtype)


def _interp_fused(x, wh, ww, w_dtype):
    N, C, H, W = x.shape
    H_out, W_out = wh.shape[0], ww.shape[0]
    NC, HW, HoWo = N * C, H * W, H_out * W_out
    isz = jnp.dtype(x.dtype).itemsize
    wsz = jnp.dtype(w_dtype).itemsize

    # Fused kron weight, built in f32 and rounded once.
    wfull = jnp.kron(wh, ww).T.astype(w_dtype)      # (HW, HoWo)
    x2 = x.reshape(NC, HW)                          # free row-major reshape

    bm = _pick_bm(NC, HW, isz)
    bn = _pick_bn(HoWo, HW, wsz)
    gi, gj = NC // bm, HoWo // bn

    block_bytes = (2 * bm * HW * isz            # x blocks (double-buffered)
                   + 2 * HW * bn * wsz          # weight blocks
                   + 2 * bm * bn * isz)         # output blocks

    out2 = pl.pallas_call(
        _interp_fused_kernel,
        out_shape=jax.ShapeDtypeStruct((NC, HoWo), x.dtype),
        grid_spec=pltpu.PrefetchScalarGridSpec(
            num_scalar_prefetch=0,
            grid=(gi, gj),
            in_specs=[
                pl.BlockSpec((bm, HW), lambda i, j: (i, 0)),
                pl.BlockSpec((HW, bn), lambda i, j: (0, j)),
            ],
            out_specs=pl.BlockSpec((bm, bn), lambda i, j: (i, j)),
        ),
        compiler_params=pltpu.CompilerParams(
            dimension_semantics=("parallel", "parallel"),
            vmem_limit_bytes=_vmem_limit_bytes(block_bytes),
        ),
        cost_estimate=pl.CostEstimate(
            flops=int(2 * NC * HW * HoWo),
            transcendentals=0,
            bytes_accessed=int(NC * HW * isz + NC * HoWo * isz
                               + gi * HW * HoWo * wsz),
        ),
    )(x2, wfull)

    return out2.reshape(N, C, H_out, W_out)


# ----------------------------------------------------------------------------
# Separable fallback for large planes: two small matmuls per plane
# ----------------------------------------------------------------------------
def _interp_sep_kernel(x_ref, wh_ref, wwt_ref, o_ref):
    # x_ref: (1, H, W); wh_ref: (H_out, H); wwt_ref: (W, W_out); o_ref: (1, H_out, W_out)
    tmp = jnp.dot(wh_ref[...], x_ref[0], preferred_element_type=jnp.float32)
    tmp = tmp.astype(wwt_ref.dtype)
    o_ref[0] = jnp.dot(tmp, wwt_ref[...],
                       preferred_element_type=jnp.float32).astype(o_ref.dtype)


def _interp_separable(x, wh, ww, w_dtype):
    N, C, H, W = x.shape
    H_out, W_out = wh.shape[0], ww.shape[0]
    NC = N * C
    isz = jnp.dtype(x.dtype).itemsize
    wsz = jnp.dtype(w_dtype).itemsize

    wh_c = wh.astype(w_dtype)                       # (H_out, H)
    wwt = ww.T.astype(w_dtype)                      # (W, W_out)
    x3 = x.reshape(NC, H, W)                        # free reshape, no transpose

    block_bytes = (2 * H * W * isz + 2 * H_out * W_out * isz
                   + 2 * (H_out * H + W * W_out) * wsz)

    out3 = pl.pallas_call(
        _interp_sep_kernel,
        out_shape=jax.ShapeDtypeStruct((NC, H_out, W_out), x.dtype),
        grid_spec=pltpu.PrefetchScalarGridSpec(
            num_scalar_prefetch=0,
            grid=(NC,),
            in_specs=[
                pl.BlockSpec((1, H, W), lambda i: (i, 0, 0)),
                pl.BlockSpec((H_out, H), lambda i: (0, 0)),
                pl.BlockSpec((W, W_out), lambda i: (0, 0)),
            ],
            out_specs=pl.BlockSpec((1, H_out, W_out), lambda i: (i, 0, 0)),
        ),
        compiler_params=pltpu.CompilerParams(
            dimension_semantics=("parallel",),
            vmem_limit_bytes=_vmem_limit_bytes(block_bytes),
        ),
        cost_estimate=pl.CostEstimate(
            flops=int(NC * (2 * H_out * H * W + 2 * H_out * W * W_out)),
            transcendentals=0,
            bytes_accessed=int(NC * (H * W + H_out * W_out) * isz
                               + (H_out * H + W * W_out) * wsz),
        ),
    )(x3, wh_c, wwt)

    return out3.reshape(N, C, H_out, W_out)


# ----------------------------------------------------------------------------
# Wrapper mirroring Interpolate.forward
# ----------------------------------------------------------------------------
@functools.partial(jax.jit, static_argnames=("size", "mode", "align_corners"))
def interpolate(x, size, mode="bilinear", align_corners=False):
    if isinstance(size, int):
        size = (size, size)
    N, C, H, W = x.shape
    H_out, W_out = size

    # bf16 inputs -> bf16 MXU operands (f32 accumulation); f32 stays f32.
    w_dtype = jnp.bfloat16 if x.dtype == jnp.bfloat16 else jnp.float32
    isz = jnp.dtype(x.dtype).itemsize
    wsz = jnp.dtype(w_dtype).itemsize

    wh = _interp_matrix(H_out, H, mode, align_corners)      # (H_out, H), f32
    ww = _interp_matrix(W_out, W, mode, align_corners)      # (W_out, W), f32

    HW, HoWo = H * W, H_out * W_out
    fused_ok = (HW * HoWo * wsz <= _FUSED_WEIGHT_LIMIT
                and 8 * HW * isz <= _X_ROWBLOCK_LIMIT)
    if fused_ok:
        return _interp_fused(x, wh, ww, w_dtype)
    return _interp_separable(x, wh, ww, w_dtype)


# ----------------------------------------------------------------------------
# Pure-JAX reference (same math, no Pallas) for a sanity check
# ----------------------------------------------------------------------------
def _interpolate_ref(x, size, mode="bilinear", align_corners=False):
    if isinstance(size, int):
        size = (size, size)
    H_out, W_out = size
    _, _, H, W = x.shape
    wh = _interp_matrix(H_out, H, mode, align_corners)
    ww = _interp_matrix(W_out, W, mode, align_corners)
    tmp = jnp.einsum("nchw,qw->nchq", x.astype(jnp.float32), ww)
    out = jnp.einsum("ph,nchq->ncpq", wh, tmp)
    return out.astype(x.dtype)


if __name__ == "__main__":
    key = jax.random.PRNGKey(0)
    k0, k1 = jax.random.split(key)

    # Module config (typical torch2trt Interpolate test):
    #   Interpolate(size=(32, 32), mode='bilinear', align_corners=False)
    size = (32, 32)
    x = jax.random.normal(k0, (2, 4, 16, 16), dtype=jnp.float32)

    out = jax.block_until_ready(
        interpolate(x, size=size, mode="bilinear", align_corners=False))
    ref = _interpolate_ref(x, size, "bilinear", False)
    assert out.shape == (2, 4, 32, 32)
    assert jnp.allclose(out, ref, atol=1e-4, rtol=1e-4)

    # align_corners=True
    out_ac = jax.block_until_ready(
        interpolate(x, size=size, mode="bilinear", align_corners=True))
    assert jnp.allclose(out_ac, _interpolate_ref(x, size, "bilinear", True),
                        atol=1e-4, rtol=1e-4)

    # nearest
    out_nn = jax.block_until_ready(
        interpolate(x, size=size, mode="nearest", align_corners=None))
    assert jnp.allclose(out_nn, _interpolate_ref(x, size, "nearest", None),
                        atol=1e-4, rtol=1e-4)

    # bf16 path (loosened tolerance: bf16 weights + bf16 output rounding)
    x_bf = x.astype(jnp.bfloat16)
    out_bf = jax.block_until_ready(
        interpolate(x_bf, size=size, mode="bilinear", align_corners=False))
    ref_bf = _interpolate_ref(x_bf, size, "bilinear", False)
    assert jnp.allclose(out_bf.astype(jnp.float32), ref_bf.astype(jnp.float32),
                        atol=1e-1, rtol=5e-2)

    # Large-plane separable fallback (fused kron weight would exceed the limit).
    x_big = jax.random.normal(k1, (1, 2, 40, 40), dtype=jnp.float32)
    out_big = jax.block_until_ready(
        interpolate(x_big, size=(80, 80), mode="bilinear", align_corners=False))
    assert out_big.shape == (1, 2, 80, 80)
    assert jnp.allclose(out_big, _interpolate_ref(x_big, (80, 80), "bilinear", False),
                        atol=1e-4, rtol=1e-4)

    print("KERNEL_OK")
</pallas_src>

<mosaic_0001>
module attributes {stable_mosaic.version = 11 : i64} {
  func.func @_interp_fused_kernel(%arg0: i32, %arg1: i32, %arg2: memref<8x256xf32, #tpu.memory_space<vmem>>, %arg3: memref<256x512xf32, #tpu.memory_space<vmem>>, %arg4: memref<8x512xf32, #tpu.memory_space<vmem>>) attributes {dimension_semantics = [#tpu.dimension_semantics<parallel>, #tpu.dimension_semantics<parallel>], iteration_bounds = array<i64: 1, 2>, scalar_prefetch = 0 : i64, scratch_operands = 0 : i64, tpu.core_type = #tpu.core_type<tc>, window_params = [{transform_indices = @transform_0, window_bounds = array<i64: 8, 256>}, {transform_indices = @transform_1, window_bounds = array<i64: 256, 512>}, {transform_indices = @transform_2, window_bounds = array<i64: 8, 512>}]} {
    %c0 = arith.constant 0 : index
    %c0_0 = arith.constant 0 : index
    %0 = vector.load %arg2[%c0, %c0_0] : memref<8x256xf32, #tpu.memory_space<vmem>>, vector<8x256xf32>
    %c0_1 = arith.constant 0 : index
    %c0_2 = arith.constant 0 : index
    %1 = vector.load %arg3[%c0_1, %c0_2] : memref<256x512xf32, #tpu.memory_space<vmem>>, vector<256x512xf32>
    %cst = arith.constant dense<0.000000e+00> : vector<8x512xf32>
    %2 = tpu.matmul %0, %1, %cst {dimension_numbers = #tpu.dot_dimension_numbers<[1], [0], [0], [1], [0, 0, 1, 1], [], []>} : vector<8x256xf32>, vector<256x512xf32>, vector<8x512xf32> -> vector<8x512xf32>
    %c0_3 = arith.constant 0 : index
    %c0_4 = arith.constant 0 : index
    %3 = vector.load %arg4[%c0_3, %c0_4] : memref<8x512xf32, #tpu.memory_space<vmem>>, vector<8x512xf32>
    tpu.vector_store %arg4[%c0_3, %c0_4], %2 {strides = array<i32>} : memref<8x512xf32, #tpu.memory_space<vmem>>, vector<8x512xf32>,
    return
  }
  func.func @transform_0(%arg0: i32, %arg1: i32) -> (i32, i32) {
    %c0_i32 = arith.constant 0 : i32
    %c0_i32_0 = arith.constant 0 : i32
    return %arg0, %c0_i32 : i32, i32
  }
  func.func @transform_1(%arg0: i32, %arg1: i32) -> (i32, i32) {
    %c0_i32 = arith.constant 0 : i32
    %c0_i32_0 = arith.constant 0 : i32
    return %c0_i32, %arg1 : i32, i32
  }
  func.func @transform_2(%arg0: i32, %arg1: i32) -> (i32, i32) {
    %c0_i32 = arith.constant 0 : i32
    return %arg0, %arg1 : i32, i32
  }
}

</mosaic_0001>

<llo_original>
// kernel: interpolate.1
$region0: #{interpolate.1}
  #allocation0 [shape = 'u32[]', space=smem, size = 0x4, offset = 0x4, fixed_abs, tag = 'smem constant byte address 0x4 - core index']
  #allocation1 [shape = 'u32[144,128]{1,0:T(1,128)}', space=vmem, size = 0x12000, scoped, tag = 'internal scratch']
  %s0 = inlined_call_operand.vmem [shape: f32[8,256], index: 0, kind: input, shape index: {}]
  %s1 = inlined_call_operand.vmem [shape: f32[256,1024], index: 1, kind: input, shape index: {}]
  %s2 = inlined_call_operand.vmem [shape: f32[8,1024], index: 2, kind: output, shape index: {}]
  %s3 = sld [smem:[#allocation0]]
  $region64: #{interpolate.1} parent=0
    _
  %s5 = ssub.s32 1, %s3
  %s6 = scalar_select 0, %s5, %s3
  $region1: #{interpolate.1} parent=0
    #allocation2 [shape = 'u8[1048576]{0}', space=vmem, size = 0x100000, scoped, tag = 'input window, operand 1']
    loop: start=0, step=1, limit=4
    $region2: #{interpolate.1} parent=1 // loop_pre_header
      _
    $region3: #{interpolate.1} parent=1 // loop_header
      %s8 = sphi 0, %s12
      %p9 = scmp.ge.s32.totalorder %s8, 4
      %s15 = sphi 0, %s27
      %s16 = sphi 0, %s23
      %s17 = sphi 0, %s15
      %s18 = sphi 0, %s16
      %s19 = sphi 0, %s17
      %s20 = sphi 0, %s18
      %s30 = sphi 0, %s32
      %s33 = sphi 0, %s30
      %s34 = sphi 0, %s33
      %s50 = sphi 0, %s34
      %s56 = sphi 0, %s58
      %s59 = sphi 0, %s56
      %s60 = sphi 0, %s59
      %s76 = sphi 0, %s60
      %s84 = sphi 0, %s86
      %s87 = sphi 0, %s84
      %s88 = sphi 0, %s87
      %s104 = sphi 0, %s88
    $region4: #{interpolate.1} parent=1 // loop_header_branch
      %11 = sbr.rel (%p9) target = $region8
    $region5: #{interpolate.1} parent=1 // loop_body
      %s13 = ssub.s32 %s8, 1
      %s14 = ssub.s32 %s8, 2
      %s21 = sadd.s32 1, %s16
      %p22 = scmp.ge.s32.totalorder %s21, 2
      %s23 = scalar_select %p22, 0, %s21
      %s24 = sadd.s32 1, %s15
      %s25 = scalar_select %p22, %s24, %s15
      %p26 = scmp.ge.s32.totalorder %s25, 1
      %s27 = scalar_select %p26, 0, %s25
      %s28 = ssub.s32 %s15, %s27
      %p29 = scmp.eq.s32.totalorder %s28, 0
      %s31 = sadd.s32 %s30, 1
      %s32 = scalar_select %p29, %s30, %s31
      %p35 = pneg %p29
      %p36 = scmp.eq.s32.totalorder %s8, 1
      %p37 = por %p35, %p36
      %p38 = scmp.ne.s32.totalorder %s30, %s33
      %p39 = scmp.eq.s32.totalorder %s8, 0
      %p40 = por %p38, %p39
      %p41 = scmp.ne.s32.totalorder %s30, %s33
      %p42 = scmp.eq.s32.totalorder %s13, 1
      %p43 = por %p41, %p42
      %p44 = scmp.ne.s32.totalorder %s33, %s34
      %p45 = scmp.eq.s32.totalorder %s13, 0
      %p46 = por %p44, %p45
      %p47 = scmp.ne.s32.totalorder %s33, %s34
      %p48 = scmp.eq.s32.totalorder %s14, 1
      %p49 = por %p47, %p48
      %p51 = scmp.ne.s32.totalorder %s34, %s50
      %p52 = scmp.eq.s32.totalorder %s14, 0
      %p53 = por %p51, %p52
      %s54 = ssub.s32 %s16, %s23
      %p55 = scmp.eq.s32.totalorder %s54, 0
      %s57 = sadd.s32 %s56, 1
      %s58 = scalar_select %p55, %s56, %s57
      %p61 = pneg %p55
      %p62 = scmp.eq.s32.totalorder %s8, 1
      %p63 = por %p61, %p62
      %p64 = scmp.ne.s32.totalorder %s56, %s59
      %p65 = scmp.eq.s32.totalorder %s8, 0
      %p66 = por %p64, %p65
      %p67 = scmp.ne.s32.totalorder %s56, %s59
      %p68 = scmp.eq.s32.totalorder %s13, 1
      %p69 = por %p67, %p68
      %p70 = scmp.ne.s32.totalorder %s59, %s60
      %p71 = scmp.eq.s32.totalorder %s13, 0
      %p72 = por %p70, %p71
      %p73 = scmp.ne.s32.totalorder %s59, %s60
      %p74 = scmp.eq.s32.totalorder %s14, 1
      %p75 = por %p73, %p74
      %p77 = scmp.ne.s32.totalorder %s60, %s76
      %p78 = scmp.eq.s32.totalorder %s14, 0
      %p79 = por %p77, %p78
      %s80 = ssub.s32 %s15, %s27
      %s81 = ssub.s32 %s16, %s23
      %s82 = sor.u32 %s80, %s81
      %p83 = scmp.eq.s32.totalorder %s82, 0
      %s85 = sadd.s32 %s84, 1
      %s86 = scalar_select %p83, %s84, %s85
      %p89 = pneg %p83
      %p90 = scmp.eq.s32.totalorder %s8, 1
      %p91 = por %p89, %p90
      %p92 = scmp.ne.s32.totalorder %s84, %s87
      %p93 = scmp.eq.s32.totalorder %s8, 0
      %p94 = por %p92, %p93
      %p95 = scmp.ne.s32.totalorder %s84, %s87
      %p96 = scmp.eq.s32.totalorder %s13, 1
      %p97 = por %p95, %p96
      %p98 = scmp.ne.s32.totalorder %s87, %s88
      %p99 = scmp.eq.s32.totalorder %s13, 0
      %p100 = por %p98, %p99
      %p101 = scmp.ne.s32.totalorder %s87, %s88
      %p102 = scmp.eq.s32.totalorder %s14, 1
      %p103 = por %p101, %p102
      %p105 = scmp.ne.s32.totalorder %s88, %s104
      %p106 = scmp.eq.s32.totalorder %s14, 0
      %p107 = por %p105, %p106
      %p108 = scmp.le.s32.totalorder 1, %s8
      %p109 = scmp.lt.s32.totalorder %s8, 3
      %p110 = pnand %p108, %p109
      %p111 = pneg %p110
      // Predicated region
      $region9: #{interpolate.1} parent=5 // pred_check
        _
      $region10: #{interpolate.1} parent=5 // pred_check_branch
        %113 = sbr.rel (%p110) target = $region12
      $region11: #{interpolate.1} parent=5 // pred_region
        %s114 = ssub.s32 %s8, 1
        // Predicated region
        $region13: #{interpolate.1} parent=11 // pred_check
          %p115 = pneg %p46
        $region14: #{interpolate.1} parent=11 // pred_check_branch
          %117 = sbr.rel (%p115) target = $region16
        $region15: #{interpolate.1} parent=11 // pred_region
          %p118 = scmp.lt.s32.totalorder %s17, 0
          %s119 = scalar_select %p118, %s17, 0
          %s120 = smul.addr %s119, 2
          %s121 = smul.addr %s120, 8
          %s122 = scalar_lea.vmem %s0, %s121
        $region16: #{interpolate.1} parent=11 // pred_fallthru
          _
      $region12: #{interpolate.1} parent=5 // pred_fallthru
        _
      %p123 = scmp.lt.s32.totalorder %s8, 2
      // Predicated region
      $region17: #{interpolate.1} parent=5 // pred_check
        %p124 = pneg %p123
      $region18: #{interpolate.1} parent=5 // pred_check_branch
        %126 = sbr.rel (%p124) target = $region20
      $region19: #{interpolate.1} parent=5 // pred_region
        // Predicated region
        $region21: #{interpolate.1} parent=19 // pred_check
          %p127 = pneg %p66
        $region22: #{interpolate.1} parent=19 // pred_check_branch
          %129 = sbr.rel (%p127) target = $region24
        $region23: #{interpolate.1} parent=19 // pred_region
          %s130 = sand.u32 %s56, 1
          %s131 = sand.u32 %s56, 1
          %s132 = smul.addr %s131, 1024
          %s133 = scalar_lea.vmem [#allocation2], %s132
          %s134 = smul.u32 4, %s16
          %s135 = smul.addr %s134, 8
          %s136 = scalar_lea.vmem %s1, %s135
          // Predicated region
          $region25: #{interpolate.1} parent=23 // pred_check
            _
          $region26: #{interpolate.1} parent=23 // pred_check_branch
            %138 = sbr.rel (0) target = $region28
          $region27: #{interpolate.1} parent=23 // pred_region
            // Predicated region
            $region29: #{interpolate.1} parent=27 // pred_check
              _
            $region30: #{interpolate.1} parent=27 // pred_check_branch
              %140 = sbr.rel (0) target = $region32
            $region31: #{interpolate.1} parent=27 // pred_region
              loop: start=0, step=1, limit=1
              $region33: #{interpolate.1} parent=31 // loop_pre_header
                _
              $region34: #{interpolate.1} parent=31 // loop_header
                %s142 = sphi 0, %s146
                %p143 = scmp.ge.s32.totalorder %s142, 1
                %s147 = sphi %s136, %s136
                %s148 = sphi %s133, %s133
              $region35: #{interpolate.1} parent=31 // loop_header_branch
                %145 = sbr.rel (%p143) target = $region39
              $region36: #{interpolate.1} parent=31 // loop_body
                %v149 = vld [vmem:[%s147] sm:$0xff]
                %150 = vst [vmem:[%s148] sm:$0xff] %v149
                %v151 = vld [vmem:[%s147 + $0x8] sm:$0xff]
                %152 = vst [vmem:[%s148 + $0x8] sm:$0xff] %v151
                %v153 = vld [vmem:[%s147 + $0x10] sm:$0xff]
                %154 = vst [vmem:[%s148 + $0x10] sm:$0xff] %v153
                %v155 = vld [vmem:[%s147 + $0x18] sm:$0xff]
                %156 = vst [vmem:[%s148 + $0x18] sm:$0xff] %v155
                %v157 = vld [vmem:[%s147 + $0x40] sm:$0xff]
                %158 = vst [vmem:[%s148 + $0x20] sm:$0xff] %v157
                %v159 = vld [vmem:[%s147 + $0x48] sm:$0xff]
                %160 = vst [vmem:[%s148 + $0x28] sm:$0xff] %v159
                %v161 = vld [vmem:[%s147 + $0x50] sm:$0xff]
                %162 = vst [vmem:[%s148 + $0x30] sm:$0xff] %v161
                %v163 = vld [vmem:[%s147 + $0x58] sm:$0xff]
                %164 = vst [vmem:[%s148 + $0x38] sm:$0xff] %v163
                %v165 = vld [vmem:[%s147 + $0x80] sm:$0xff]
                %166 = vst [vmem:[%s148 + $0x40] sm:$0xff] %v165
                %v167 = vld [vmem:[%s147 + $0x88] sm:$0xff]
                %168 = vst [vmem:[%s148 + $0x48] sm:$0xff] %v167
                %v169 = vld [vmem:[%s147 + $0x90] sm:$0xff]
                %170 = vst [vmem:[%s148 + $0x50] sm:$0xff] %v169
                %v171 = vld [vmem:[%s147 + $0x98] sm:$0xff]
                %172 = vst [vmem:[%s148 + $0x58] sm:$0xff] %v171
                %v173 = vld [vmem:[%s147 + $0xc0] sm:$0xff]
                %174 = vst [vmem:[%s148 + $0x60] sm:$0xff] %v173
                %v175 = vld [vmem:[%s147 + $0xc8] sm:$0xff]
                %176 = vst [vmem:[%s148 + $0x68] sm:$0xff] %v175
                %v177 = vld [vmem:[%s147 + $0xd0] sm:$0xff]
                %178 = vst [vmem:[%s148 + $0x70] sm:$0xff] %v177
                %v179 = vld [vmem:[%s147 + $0xd8] sm:$0xff]
                %180 = vst [vmem:[%s148 + $0x78] sm:$0xff] %v179
                %v181 = vld [vmem:[%s147 + $0x100] sm:$0xff]
                %182 = vst [vmem:[%s148 + $0x80] sm:$0xff] %v181
                %v183 = vld [vmem:[%s147 + $0x108] sm:$0xff]
                %184 = vst [vmem:[%s148 + $0x88] sm:$0xff] %v183
                %v185 = vld [vmem:[%s147 + $0x110] sm:$0xff]
                %186 = vst [vmem:[%s148 + $0x90] sm:$0xff] %v185
                %v187 = vld [vmem:[%s147 + $0x118] sm:$0xff]
                %188 = vst [vmem:[%s148 + $0x98] sm:$0xff] %v187
                %v189 = vld [vmem:[%s147 + $0x140] sm:$0xff]
                %190 = vst [vmem:[%s148 + $0xa0] sm:$0xff] %v189
                %v191 = vld [vmem:[%s147 + $0x148] sm:$0xff]
                %192 = vst [vmem:[%s148 + $0xa8] sm:$0xff] %v191
                %v193 = vld [vmem:[%s147 + $0x150] sm:$0xff]
                %194 = vst [vmem:[%s148 + $0xb0] sm:$0xff] %v193
                %v195 = vld [vmem:[%s147 + $0x158] sm:$0xff]
                %196 = vst [vmem:[%s148 + $0xb8] sm:$0xff] %v195
                %v197 = vld [vmem:[%s147 + $0x180] sm:$0xff]
                %198 = vst [vmem:[%s148 + $0xc0] sm:$0xff] %v197
                %v199 = vld [vmem:[%s147 + $0x188] sm:$0xff]
                %200 = vst [vmem:[%s148 + $0xc8] sm:$0xff] %v199
                %v201 = vld [vmem:[%s147 + $0x190] sm:$0xff]
                %202 = vst [vmem:[%s148 + $0xd0] sm:$0xff] %v201
                %v203 = vld [vmem:[%s147 + $0x198] sm:$0xff]
                %204 = vst [vmem:[%s148 + $0xd8] sm:$0xff] %v203
                %v205 = vld [vmem:[%s147 + $0x1c0] sm:$0xff]
                %206 = vst [vmem:[%s148 + $0xe0] sm:$0xff] %v205
                %v207 = vld [vmem:[%s147 + $0x1c8] sm:$0xff]
                %208 = vst [vmem:[%s148 + $0xe8] sm:$0xff] %v207
                %v209 = vld [vmem:[%s147 + $0x1d0] sm:$0xff]
                %210 = vst [vmem:[%s148 + $0xf0] sm:$0xff] %v209
                %v211 = vld [vmem:[%s147 + $0x1d8] sm:$0xff]
                %212 = vst [vmem:[%s148 + $0xf8] sm:$0xff] %v211
                %v213 = vld [vmem:[%s147 + $0x200] sm:$0xff]
                %214 = vst [vmem:[%s148 + $0x100] sm:$0xff] %v213
                %v215 = vld [vmem:[%s147 + $0x208] sm:$0xff]
                %216 = vst [vmem:[%s148 + $0x108] sm:$0xff] %v215
                %v217 = vld [vmem:[%s147 + $0x210] sm:$0xff]
                %218 = vst [vmem:[%s148 + $0x110] sm:$0xff] %v217
                %v219 = vld [vmem:[%s147 + $0x218] sm:$0xff]
                %220 = vst [vmem:[%s148 + $0x118] sm:$0xff] %v219
                %v221 = vld [vmem:[%s147 + $0x240] sm:$0xff]
                %222 = vst [vmem:[%s148 + $0x120] sm:$0xff] %v221
                %v223 = vld [vmem:[%s147 + $0x248] sm:$0xff]
                %224 = vst [vmem:[%s148 + $0x128] sm:$0xff] %v223
                %v225 = vld [vmem:[%s147 + $0x250] sm:$0xff]
                %226 = vst [vmem:[%s148 + $0x130] sm:$0xff] %v225
                %v227 = vld [vmem:[%s147 + $0x258] sm:$0xff]
                %228 = vst [vmem:[%s148 + $0x138] sm:$0xff] %v227
                %v229 = vld [vmem:[%s147 + $0x280] sm:$0xff]
                %230 = vst [vmem:[%s148 + $0x140] sm:$0xff] %v229
                %v231 = vld [vmem:[%s147 + $0x288] sm:$0xff]
                %232 = vst [vmem:[%s148 + $0x148] sm:$0xff] %v231
                %v233 = vld [vmem:[%s147 + $0x290] sm:$0xff]
                %234 = vst [vmem:[%s148 + $0x150] sm:$0xff] %v233
                %v235 = vld [vmem:[%s147 + $0x298] sm:$0xff]
                %236 = vst [vmem:[%s148 + $0x158] sm:$0xff] %v235
                %v237 = vld [vmem:[%s147 + $0x2c0] sm:$0xff]
                %238 = vst [vmem:[%s148 + $0x160] sm:$0xff] %v237
                %v239 = vld [vmem:[%s147 + $0x2c8] sm:$0xff]
                %240 = vst [vmem:[%s148 + $0x168] sm:$0xff] %v239
                %v241 = vld [vmem:[%s147 + $0x2d0] sm:$0xff]
                %242 = vst [vmem:[%s148 + $0x170] sm:$0xff] %v241
                %v243 = vld [vmem:[%s147 + $0x2d8] sm:$0xff]
                %244 = vst [vmem:[%s148 + $0x178] sm:$0xff] %v243
                %v245 = vld [vmem:[%s147 + $0x300] sm:$0xff]
                %246 = vst [vmem:[%s148 + $0x180] sm:$0xff] %v245
                %v247 = vld [vmem:[%s147 + $0x308] sm:$0xff]
                %248 = vst [vmem:[%s148 + $0x188] sm:$0xff] %v247
                %v249 = vld [vmem:[%s147 + $0x310] sm:$0xff]
                %250 = vst [vmem:[%s148 + $0x190] sm:$0xff] %v249
                %v251 = vld [vmem:[%s147 + $0x318] sm:$0xff]
                %252 = vst [vmem:[%s148 + $0x198] sm:$0xff] %v251
                %v253 = vld [vmem:[%s147 + $0x340] sm:$0xff]
                %254 = vst [vmem:[%s148 + $0x1a0] sm:$0xff] %v253
                %v255 = vld [vmem:[%s147 + $0x348] sm:$0xff]
                %256 = vst [vmem:[%s148 + $0x1a8] sm:$0xff] %v255
                %v257 = vld [vmem:[%s147 + $0x350] sm:$0xff]
                %258 = vst [vmem:[%s148 + $0x1b0] sm:$0xff] %v257
                %v259 = vld [vmem:[%s147 + $0x358] sm:$0xff]
                %260 = vst [vmem:[%s148 + $0x1b8] sm:$0xff] %v259
                %v261 = vld [vmem:[%s147 + $0x380] sm:$0xff]
                %262 = vst [vmem:[%s148 + $0x1c0] sm:$0xff] %v261
                %v263 = vld [vmem:[%s147 + $0x388] sm:$0xff]
                %264 = vst [vmem:[%s148 + $0x1c8] sm:$0xff] %v263
                %v265 = vld [vmem:[%s147 + $0x390] sm:$0xff]
                %266 = vst [vmem:[%s148 + $0x1d0] sm:$0xff] %v265
                %v267 = vld [vmem:[%s147 + $0x398] sm:$0xff]
                %268 = vst [vmem:[%s148 + $0x1d8] sm:$0xff] %v267
                %v269 = vld [vmem:[%s147 + $0x3c0] sm:$0xff]
                %270 = vst [vmem:[%s148 + $0x1e0] sm:$0xff] %v269
                %v271 = vld [vmem:[%s147 + $0x3c8] sm:$0xff]
                %272 = vst [vmem:[%s148 + $0x1e8] sm:$0xff] %v271
                %v273 = vld [vmem:[%s147 + $0x3d0] sm:$0xff]
                %274 = vst [vmem:[%s148 + $0x1f0] sm:$0xff] %v273
                %v275 = vld [vmem:[%s147 + $0x3d8] sm:$0xff]
                %276 = vst [vmem:[%s148 + $0x1f8] sm:$0xff] %v275
                %v277 = vld [vmem:[%s147 + $0x400] sm:$0xff]
                %278 = vst [vmem:[%s148 + $0x200] sm:$0xff] %v277
                %v279 = vld [vmem:[%s147 + $0x408] sm:$0xff]
                %280 = vst [vmem:[%s148 + $0x208] sm:$0xff] %v279
                %v281 = vld [vmem:[%s147 + $0x410] sm:$0xff]
                %282 = vst [vmem:[%s148 + $0x210] sm:$0xff] %v281
                %v283 = vld [vmem:[%s147 + $0x418] sm:$0xff]
                %284 = vst [vmem:[%s148 + $0x218] sm:$0xff] %v283
                %v285 = vld [vmem:[%s147 + $0x440] sm:$0xff]
                %286 = vst [vmem:[%s148 + $0x220] sm:$0xff] %v285
                %v287 = vld [vmem:[%s147 + $0x448] sm:$0xff]
                %288 = vst [vmem:[%s148 + $0x228] sm:$0xff] %v287
                %v289 = vld [vmem:[%s147 + $0x450] sm:$0xff]
                %290 = vst [vmem:[%s148 + $0x230] sm:$0xff] %v289
                %v291 = vld [vmem:[%s147 + $0x458] sm:$0xff]
                %292 = vst [vmem:[%s148 + $0x238] sm:$0xff] %v291
                %v293 = vld [vmem:[%s147 + $0x480] sm:$0xff]
                %294 = vst [vmem:[%s148 + $0x240] sm:$0xff] %v293
                %v295 = vld [vmem:[%s147 + $0x488] sm:$0xff]
                %296 = vst [vmem:[%s148 + $0x248] sm:$0xff] %v295
                %v297 = vld [vmem:[%s147 + $0x490] sm:$0xff]
                %298 = vst [vmem:[%s148 + $0x250] sm:$0xff] %v297
                %v299 = vld [vmem:[%s147 + $0x498] sm:$0xff]
                %300 = vst [vmem:[%s148 + $0x258] sm:$0xff] %v299
                %v301 = vld [vmem:[%s147 + $0x4c0] sm:$0xff]
                %302 = vst [vmem:[%s148 + $0x260] sm:$0xff] %v301
                %v303 = vld [vmem:[%s147 + $0x4c8] sm:$0xff]
                %304 = vst [vmem:[%s148 + $0x268] sm:$0xff] %v303
                %v305 = vld [vmem:[%s147 + $0x4d0] sm:$0xff]
                %306 = vst [vmem:[%s148 + $0x270] sm:$0xff] %v305
                %v307 = vld [vmem:[%s147 + $0x4d8] sm:$0xff]
                %308 = vst [vmem:[%s148 + $0x278] sm:$0xff] %v307
                %v309 = vld [vmem:[%s147 + $0x500] sm:$0xff]
                %310 = vst [vmem:[%s148 + $0x280] sm:$0xff] %v309
                %v311 = vld [vmem:[%s147 + $0x508] sm:$0xff]
                %312 = vst [vmem:[%s148 + $0x288] sm:$0xff] %v311
                %v313 = vld [vmem:[%s147 + $0x510] sm:$0xff]
                %314 = vst [vmem:[%s148 + $0x290] sm:$0xff] %v313
                %v315 = vld [vmem:[%s147 + $0x518] sm:$0xff]
                %316 = vst [vmem:[%s148 + $0x298] sm:$0xff] %v315
                %v317 = vld [vmem:[%s147 + $0x540] sm:$0xff]
                %318 = vst [vmem:[%s148 + $0x2a0] sm:$0xff] %v317
                %v319 = vld [vmem:[%s147 + $0x548] sm:$0xff]
                %320 = vst [vmem:[%s148 + $0x2a8] sm:$0xff] %v319
                %v321 = vld [vmem:[%s147 + $0x550] sm:$0xff]
                %322 = vst [vmem:[%s148 + $0x2b0] sm:$0xff] %v321
                %v323 = vld [vmem:[%s147 + $0x558] sm:$0xff]
                %324 = vst [vmem:[%s148 + $0x2b8] sm:$0xff] %v323
                %v325 = vld [vmem:[%s147 + $0x580] sm:$0xff]
                %326 = vst [vmem:[%s148 + $0x2c0] sm:$0xff] %v325
                %v327 = vld [vmem:[%s147 + $0x588] sm:$0xff]
                %328 = vst [vmem:[%s148 + $0x2c8] sm:$0xff] %v327
                %v329 = vld [vmem:[%s147 + $0x590] sm:$0xff]
                %330 = vst [vmem:[%s148 + $0x2d0] sm:$0xff] %v329
                %v331 = vld [vmem:[%s147 + $0x598] sm:$0xff]
                %332 = vst [vmem:[%s148 + $0x2d8] sm:$0xff] %v331
                %v333 = vld [vmem:[%s147 + $0x5c0] sm:$0xff]
                %334 = vst [vmem:[%s148 + $0x2e0] sm:$0xff] %v333
                %v335 = vld [vmem:[%s147 + $0x5c8] sm:$0xff]
                %336 = vst [vmem:[%s148 + $0x2e8] sm:$0xff] %v335
                %v337 = vld [vmem:[%s147 + $0x5d0] sm:$0xff]
                %338 = vst [vmem:[%s148 + $0x2f0] sm:$0xff] %v337
                %v339 = vld [vmem:[%s147 + $0x5d8] sm:$0xff]
                %340 = vst [vmem:[%s148 + $0x2f8] sm:$0xff] %v339
                %v341 = vld [vmem:[%s147 + $0x600] sm:$0xff]
                %342 = vst [vmem:[%s148 + $0x300] sm:$0xff] %v341
                %v343 = vld [vmem:[%s147 + $0x608] sm:$0xff]
                %344 = vst [vmem:[%s148 + $0x308] sm:$0xff] %v343
                %v345 = vld [vmem:[%s147 + $0x610] sm:$0xff]
                %346 = vst [vmem:[%s148 + $0x310] sm:$0xff] %v345
                %v347 = vld [vmem:[%s147 + $0x618] sm:$0xff]
                %348 = vst [vmem:[%s148 + $0x318] sm:$0xff] %v347
                %v349 = vld [vmem:[%s147 + $0x640] sm:$0xff]
                %350 = vst [vmem:[%s148 + $0x320] sm:$0xff] %v349
                %v351 = vld [vmem:[%s147 + $0x648] sm:$0xff]
                %352 = vst [vmem:[%s148 + $0x328] sm:$0xff] %v351
                %v353 = vld [vmem:[%s147 + $0x650] sm:$0xff]
                %354 = vst [vmem:[%s148 + $0x330] sm:$0xff] %v353
                %v355 = vld [vmem:[%s147 + $0x658] sm:$0xff]
                %356 = vst [vmem:[%s148 + $0x338] sm:$0xff] %v355
                %v357 = vld [vmem:[%s147 + $0x680] sm:$0xff]
                %358 = vst [vmem:[%s148 + $0x340] sm:$0xff] %v357
                %v359 = vld [vmem:[%s147 + $0x688] sm:$0xff]
                %360 = vst [vmem:[%s148 + $0x348] sm:$0xff] %v359
                %v361 = vld [vmem:[%s147 + $0x690] sm:$0xff]
                %362 = vst [vmem:[%s148 + $0x350] sm:$0xff] %v361
                %v363 = vld [vmem:[%s147 + $0x698] sm:$0xff]
                %364 = vst [vmem:[%s148 + $0x358] sm:$0xff] %v363
                %v365 = vld [vmem:[%s147 + $0x6c0] sm:$0xff]
                %366 = vst [vmem:[%s148 + $0x360] sm:$0xff] %v365
                %v367 = vld [vmem:[%s147 + $0x6c8] sm:$0xff]
                %368 = vst [vmem:[%s148 + $0x368] sm:$0xff] %v367
                %v369 = vld [vmem:[%s147 + $0x6d0] sm:$0xff]
                %370 = vst [vmem:[%s148 + $0x370] sm:$0xff] %v369
                %v371 = vld [vmem:[%s147 + $0x6d8] sm:$0xff]
                %372 = vst [vmem:[%s148 + $0x378] sm:$0xff] %v371
                %v373 = vld [vmem:[%s147 + $0x700] sm:$0xff]
                %374 = vst [vmem:[%s148 + $0x380] sm:$0xff] %v373
                %v375 = vld [vmem:[%s147 + $0x708] sm:$0xff]
                %376 = vst [vmem:[%s148 + $0x388] sm:$0xff] %v375
                %v377 = vld [vmem:[%s147 + $0x710] sm:$0xff]
                %378 = vst [vmem:[%s148 + $0x390] sm:$0xff] %v377
                %v379 = vld [vmem:[%s147 + $0x718] sm:$0xff]
                %380 = vst [vmem:[%s148 + $0x398] sm:$0xff] %v379
                %v381 = vld [vmem:[%s147 + $0x740] sm:$0xff]
                %382 = vst [vmem:[%s148 + $0x3a0] sm:$0xff] %v381
                %v383 = vld [vmem:[%s147 + $0x748] sm:$0xff]
                %384 = vst [vmem:[%s148 + $0x3a8] sm:$0xff] %v383
                %v385 = vld [vmem:[%s147 + $0x750] sm:$0xff]
                %386 = vst [vmem:[%s148 + $0x3b0] sm:$0xff] %v385
                %v387 = vld [vmem:[%s147 + $0x758] sm:$0xff]
                %388 = vst [vmem:[%s148 + $0x3b8] sm:$0xff] %v387
                %v389 = vld [vmem:[%s147 + $0x780] sm:$0xff]
                %390 = vst [vmem:[%s148 + $0x3c0] sm:$0xff] %v389
                %v391 = vld [vmem:[%s147 + $0x788] sm:$0xff]
                %392 = vst [vmem:[%s148 + $0x3c8] sm:$0xff] %v391
                %v393 = vld [vmem:[%s147 + $0x790] sm:$0xff]
                %394 = vst [vmem:[%s148 + $0x3d0] sm:$0xff] %v393
                %v395 = vld [vmem:[%s147 + $0x798] sm:$0xff]
                %396 = vst [vmem:[%s148 + $0x3d8] sm:$0xff] %v395
                %v397 = vld [vmem:[%s147 + $0x7c0] sm:$0xff]
                %398 = vst [vmem:[%s148 + $0x3e0] sm:$0xff] %v397
                %v399 = vld [vmem:[%s147 + $0x7c8] sm:$0xff]
                %400 = vst [vmem:[%s148 + $0x3e8] sm:$0xff] %v399
                %v401 = vld [vmem:[%s147 + $0x7d0] sm:$0xff]
                %402 = vst [vmem:[%s148 + $0x3f0] sm:$0xff] %v401
                %v403 = vld [vmem:[%s147 + $0x7d8] sm:$0xff]
                %404 = vst [vmem:[%s148 + $0x3f8] sm:$0xff] %v403
              $region37: #{interpolate.1} parent=31 // loop_footer
                %s146 = sadd.s32 1, %s142
              $region38: #{interpolate.1} parent=31 // loop_footer_branch
                %141 = sbr.rel target = $region34
              $region39: #{interpolate.1} parent=31 // loop_exit
                _
            $region32: #{interpolate.1} parent=27 // pred_fallthru
              _
            // Predicated region
            $region40: #{interpolate.1} parent=27 // pred_check
              _
            $region41: #{interpolate.1} parent=27 // pred_check_branch
              %406 = sbr.rel target = $region43
            $region42: #{interpolate.1} parent=27 // pred_region
              _
            $region43: #{interpolate.1} parent=27 // pred_fallthru
              _
          $region28: #{interpolate.1} parent=23 // pred_fallthru
            _
          %407 = vnop
        $region24: #{interpolate.1} parent=19 // pred_fallthru
          _
      $region20: #{interpolate.1} parent=5 // pred_fallthru
        _
      %p408 = scmp.le.s32.totalorder 1, %s8
      %p409 = scmp.lt.s32.totalorder %s8, 3
      %p410 = pnand %p408, %p409
      %p411 = pneg %p410
      // Predicated region
      $region44: #{interpolate.1} parent=5 // pred_check
        _
      $region45: #{interpolate.1} parent=5 // pred_check_branch
        %413 = sbr.rel (%p410) target = $region47
      $region46: #{interpolate.1} parent=5 // pred_region
        %s414 = ssub.s32 %s8, 1
        %s415 = sand.u32 %s59, 1
        %s416 = sand.u32 %s59, 1
        %s417 = smul.addr %s416, 1024
        %s418 = scalar_lea.vmem [#allocation2], %s417
        // Predicated region
        $region48: #{interpolate.1} parent=46 // pred_check
          %p419 = pneg %p72
        $region49: #{interpolate.1} parent=46 // pred_check_branch
          %421 = sbr.rel (%p419) target = $region51
        $region50: #{interpolate.1} parent=46 // pred_region
          _
        $region51: #{interpolate.1} parent=46 // pred_fallthru
          _
        %p422 = scmp.lt.s32.totalorder %s17, 0
        %s423 = scalar_select %p422, %s17, 0
        %s424 = smul.addr %s423, 2
        %s425 = smul.addr %s424, 8
        %s426 = scalar_lea.vmem %s0, %s425
        %p427 = pneg %p46
        %p428 = pneg %p43
        %s429 = sand.u32 %s59, 1
        %s430 = sand.u32 %s59, 1
        %s431 = smul.addr %s430, 1024
        %s432 = scalar_lea.vmem [#allocation2], %s431
        %p433 = pneg %p72
        %p434 = pneg %p69
        %p435 = pneg %p100
        %p436 = pneg %p97
        %s437 = smul.u32 4, %s18
        %p438 = scmp.lt.s32.totalorder %s17, 0
        %s439 = scalar_select %p438, %s17, 0
        %p440 = scmp.lt.s32.totalorder %s437, 7
        %s441 = scalar_select %p440, %s437, 7
        %s442 = smul.addr %s439, 8
        %s443 = sadd.s32 %s441, %s442
        %s444 = smul.addr %s443, 8
        %s445 = scalar_lea.vmem %s2, %s444
        %p446 = scmp.lt.s32.totalorder %s17, 0
        %s447 = scalar_select %p446, %s17, 0
        %s448 = smul.addr %s447, 2
        %s449 = smul.addr %s448, 8
        %s450 = scalar_lea.vmem %s0, %s449
        %s451 = smul.u32 4, %s18
        %s452 = smul.u32 4, %s18
        %p453 = scmp.lt.s32.totalorder %s17, 0
        %s454 = scalar_select %p453, %s17, 0
        %p455 = scmp.lt.s32.totalorder %s452, 7
        %s456 = scalar_select %p455, %s452, 7
        %s457 = smul.addr %s454, 8
        %s458 = sadd.s32 %s456, %s457
        %s459 = smul.addr %s458, 8
        %s460 = scalar_lea.vmem %s2, %s459
        %s461 = smul.u32 4, %s18
        %v462 = vld [vmem:[%s450] sm:$0xff]
        %v463 = vld [vmem:[%s450 + $0x8] sm:$0xff]
        %v464 = vld [vmem:[%s418] sm:$0xff]
        %v465 = vld [vmem:[%s418 + $0x8] sm:$0xff]
        %v466 = vld [vmem:[%s418 + $0x10] sm:$0xff]
        %v467 = vld [vmem:[%s418 + $0x18] sm:$0xff]
        %v468 = vld [vmem:[%s418 + $0x20] sm:$0xff]
        %v469 = vld [vmem:[%s418 + $0x28] sm:$0xff]
        %v470 = vld [vmem:[%s418 + $0x30] sm:$0xff]
        %v471 = vld [vmem:[%s418 + $0x38] sm:$0xff]
        %v472 = vld [vmem:[%s418 + $0x40] sm:$0xff]
        %v473 = vld [vmem:[%s418 + $0x48] sm:$0xff]
        %v474 = vld [vmem:[%s418 + $0x50] sm:$0xff]
        %v475 = vld [vmem:[%s418 + $0x58] sm:$0xff]
        %v476 = vld [vmem:[%s418 + $0x60] sm:$0xff]
        %v477 = vld [vmem:[%s418 + $0x68] sm:$0xff]
        %v478 = vld [vmem:[%s418 + $0x70] sm:$0xff]
        %v479 = vld [vmem:[%s418 + $0x78] sm:$0xff]
        %v480 = vld [vmem:[%s418 + $0x80] sm:$0xff]
        %v481 = vld [vmem:[%s418 + $0x88] sm:$0xff]
        %v482 = vld [vmem:[%s418 + $0x90] sm:$0xff]
        %v483 = vld [vmem:[%s418 + $0x98] sm:$0xff]
        %v484 = vld [vmem:[%s418 + $0xa0] sm:$0xff]
        %v485 = vld [vmem:[%s418 + $0xa8] sm:$0xff]
        %v486 = vld [vmem:[%s418 + $0xb0] sm:$0xff]
        %v487 = vld [vmem:[%s418 + $0xb8] sm:$0xff]
        %v488 = vld [vmem:[%s418 + $0xc0] sm:$0xff]
        %v489 = vld [vmem:[%s418 + $0xc8] sm:$0xff]
        %v490 = vld [vmem:[%s418 + $0xd0] sm:$0xff]
        %v491 = vld [vmem:[%s418 + $0xd8] sm:$0xff]
        %v492 = vld [vmem:[%s418 + $0xe0] sm:$0xff]
        %v493 = vld [vmem:[%s418 + $0xe8] sm:$0xff]
        %v494 = vld [vmem:[%s418 + $0xf0] sm:$0xff]
        %v495 = vld [vmem:[%s418 + $0xf8] sm:$0xff]
        %v496 = vld [vmem:[%s418 + $0x100] sm:$0xff]
        %v497 = vld [vmem:[%s418 + $0x108] sm:$0xff]
        %v498 = vld [vmem:[%s418 + $0x110] sm:$0xff]
        %v499 = vld [vmem:[%s418 + $0x118] sm:$0xff]
        %v500 = vld [vmem:[%s418 + $0x120] sm:$0xff]
        %v501 = vld [vmem:[%s418 + $0x128] sm:$0xff]
        %v502 = vld [vmem:[%s418 + $0x130] sm:$0xff]
        %v503 = vld [vmem:[%s418 + $0x138] sm:$0xff]
        %v504 = vld [vmem:[%s418 + $0x140] sm:$0xff]
        %v505 = vld [vmem:[%s418 + $0x148] sm:$0xff]
        %v506 = vld [vmem:[%s418 + $0x150] sm:$0xff]
        %v507 = vld [vmem:[%s418 + $0x158] sm:$0xff]
        %v508 = vld [vmem:[%s418 + $0x160] sm:$0xff]
        %v509 = vld [vmem:[%s418 + $0x168] sm:$0xff]
        %v510 = vld [vmem:[%s418 + $0x170] sm:$0xff]
        %v511 = vld [vmem:[%s418 + $0x178] sm:$0xff]
        %v512 = vld [vmem:[%s418 + $0x180] sm:$0xff]
        %v513 = vld [vmem:[%s418 + $0x188] sm:$0xff]
        %v514 = vld [vmem:[%s418 + $0x190] sm:$0xff]
        %v515 = vld [vmem:[%s418 + $0x198] sm:$0xff]
        %v516 = vld [vmem:[%s418 + $0x1a0] sm:$0xff]
        %v517 = vld [vmem:[%s418 + $0x1a8] sm:$0xff]
        %v518 = vld [vmem:[%s418 + $0x1b0] sm:$0xff]
        %v519 = vld [vmem:[%s418 + $0x1b8] sm:$0xff]
        %v520 = vld [vmem:[%s418 + $0x1c0] sm:$0xff]
        %v521 = vld [vmem:[%s418 + $0x1c8] sm:$0xff]
        %v522 = vld [vmem:[%s418 + $0x1d0] sm:$0xff]
        %v523 = vld [vmem:[%s418 + $0x1d8] sm:$0xff]
        %v524 = vld [vmem:[%s418 + $0x1e0] sm:$0xff]
        %v525 = vld [vmem:[%s418 + $0x1e8] sm:$0xff]
        %v526 = vld [vmem:[%s418 + $0x1f0] sm:$0xff]
        %v527 = vld [vmem:[%s418 + $0x1f8] sm:$0xff]
        %v528 = vld [vmem:[%s418 + $0x200] sm:$0xff]
        %v529 = vld [vmem:[%s418 + $0x208] sm:$0xff]
        %v530 = vld [vmem:[%s418 + $0x210] sm:$0xff]
        %v531 = vld [vmem:[%s418 + $0x218] sm:$0xff]
        %v532 = vld [vmem:[%s418 + $0x220] sm:$0xff]
        %v533 = vld [vmem:[%s418 + $0x228] sm:$0xff]
        %v534 = vld [vmem:[%s418 + $0x230] sm:$0xff]
        %v535 = vld [vmem:[%s418 + $0x238] sm:$0xff]
        %v536 = vld [vmem:[%s418 + $0x240] sm:$0xff]
        %v537 = vld [vmem:[%s418 + $0x248] sm:$0xff]
        %v538 = vld [vmem:[%s418 + $0x250] sm:$0xff]
        %v539 = vld [vmem:[%s418 + $0x258] sm:$0xff]
        %v540 = vld [vmem:[%s418 + $0x260] sm:$0xff]
        %v541 = vld [vmem:[%s418 + $0x268] sm:$0xff]
        %v542 = vld [vmem:[%s418 + $0x270] sm:$0xff]
        %v543 = vld [vmem:[%s418 + $0x278] sm:$0xff]
        %v544 = vld [vmem:[%s418 + $0x280] sm:$0xff]
        %v545 = vld [vmem:[%s418 + $0x288] sm:$0xff]
        %v546 = vld [vmem:[%s418 + $0x290] sm:$0xff]
        %v547 = vld [vmem:[%s418 + $0x298] sm:$0xff]
        %v548 = vld [vmem:[%s418 + $0x2a0] sm:$0xff]
        %v549 = vld [vmem:[%s418 + $0x2a8] sm:$0xff]
        %v550 = vld [vmem:[%s418 + $0x2b0] sm:$0xff]
        %v551 = vld [vmem:[%s418 + $0x2b8] sm:$0xff]
        %v552 = vld [vmem:[%s418 + $0x2c0] sm:$0xff]
        %v553 = vld [vmem:[%s418 + $0x2c8] sm:$0xff]
        %v554 = vld [vmem:[%s418 + $0x2d0] sm:$0xff]
        %v555 = vld [vmem:[%s418 + $0x2d8] sm:$0xff]
        %v556 = vld [vmem:[%s418 + $0x2e0] sm:$0xff]
        %v557 = vld [vmem:[%s418 + $0x2e8] sm:$0xff]
        %v558 = vld [vmem:[%s418 + $0x2f0] sm:$0xff]
        %v559 = vld [vmem:[%s418 + $0x2f8] sm:$0xff]
        %v560 = vld [vmem:[%s418 + $0x300] sm:$0xff]
        %v561 = vld [vmem:[%s418 + $0x308] sm:$0xff]
        %v562 = vld [vmem:[%s418 + $0x310] sm:$0xff]
        %v563 = vld [vmem:[%s418 + $0x318] sm:$0xff]
        %v564 = vld [vmem:[%s418 + $0x320] sm:$0xff]
        %v565 = vld [vmem:[%s418 + $0x328] sm:$0xff]
        %v566 = vld [vmem:[%s418 + $0x330] sm:$0xff]
        %v567 = vld [vmem:[%s418 + $0x338] sm:$0xff]
        %v568 = vld [vmem:[%s418 + $0x340] sm:$0xff]
        %v569 = vld [vmem:[%s418 + $0x348] sm:$0xff]
        %v570 = vld [vmem:[%s418 + $0x350] sm:$0xff]
        %v571 = vld [vmem:[%s418 + $0x358] sm:$0xff]
        %v572 = vld [vmem:[%s418 + $0x360] sm:$0xff]
        %v573 = vld [vmem:[%s418 + $0x368] sm:$0xff]
        %v574 = vld [vmem:[%s418 + $0x370] sm:$0xff]
        %v575 = vld [vmem:[%s418 + $0x378] sm:$0xff]
        %v576 = vld [vmem:[%s418 + $0x380] sm:$0xff]
        %v577 = vld [vmem:[%s418 + $0x388] sm:$0xff]
        %v578 = vld [vmem:[%s418 + $0x390] sm:$0xff]
        %v579 = vld [vmem:[%s418 + $0x398] sm:$0xff]
        %v580 = vld [vmem:[%s418 + $0x3a0] sm:$0xff]
        %v581 = vld [vmem:[%s418 + $0x3a8] sm:$0xff]
        %v582 = vld [vmem:[%s418 + $0x3b0] sm:$0xff]
        %v583 = vld [vmem:[%s418 + $0x3b8] sm:$0xff]
        %v584 = vld [vmem:[%s418 + $0x3c0] sm:$0xff]
        %v585 = vld [vmem:[%s418 + $0x3c8] sm:$0xff]
        %v586 = vld [vmem:[%s418 + $0x3d0] sm:$0xff]
        %v587 = vld [vmem:[%s418 + $0x3d8] sm:$0xff]
        %v588 = vld [vmem:[%s418 + $0x3e0] sm:$0xff]
        %v589 = vld [vmem:[%s418 + $0x3e8] sm:$0xff]
        %v590 = vld [vmem:[%s418 + $0x3f0] sm:$0xff]
        %v591 = vld [vmem:[%s418 + $0x3f8] sm:$0xff]
        %592 = vmatprep.subr.mxu0 %v525
        %593 = vmatpush1.msra.mxu0 %v524
        %594 = vmatprep.subr.mxu0 %v521
        %595 = vmatpush1.msra.mxu0 %v520
        %596 = vmatprep.subr.mxu0 %v517
        %597 = vmatpush1.msra.mxu0 %v516
        %598 = vmatprep.subr.mxu0 %v513
        %599 = vmatpush1.msra.mxu0 %v512
        %600 = vmatprep.subr.mxu0 %v509
        %601 = vmatpush1.msra.mxu0 %v508
        %602 = vmatprep.subr.mxu0 %v505
        %603 = vmatpush1.msra.mxu0 %v504
        %604 = vmatprep.subr.mxu0 %v501
        %605 = vmatpush1.msra.mxu0 %v500
        %606 = vmatprep.subr.mxu0 %v497
        %607 = vmatpush1.msra.mxu0 %v496
        %608 = vmatprep.subr.mxu0 %v493
        %609 = vmatpush1.msra.mxu0 %v492
        %610 = vmatprep.subr.mxu0 %v489
        %611 = vmatpush1.msra.mxu0 %v488
        %612 = vmatprep.subr.mxu0 %v485
        %613 = vmatpush1.msra.mxu0 %v484
        %614 = vmatprep.subr.mxu0 %v481
        %615 = vmatpush1.msra.mxu0 %v480
        %616 = vmatprep.subr.mxu0 %v477
        %617 = vmatpush1.msra.mxu0 %v476
        %618 = vmatprep.subr.mxu0 %v473
        %619 = vmatpush1.msra.mxu0 %v472
        %620 = vmatprep.subr.mxu0 %v469
        %621 = vmatpush1.msra.mxu0 %v468
        %622 = vmatprep.subr.mxu0 %v465
        %623 = vmatpush1.msra.mxu0 %v464
        %624 = vmatprep.subr.mxu0 %v589
        %625 = vmatpush2.msra.mxu0 %v588
        %626 = vmatprep.subr.mxu0 %v585
        %627 = vmatpush2.msra.mxu0 %v584
        %628 = vmatprep.subr.mxu0 %v581
        %629 = vmatpush2.msra.mxu0 %v580
        %630 = vmatprep.subr.mxu0 %v577
        %631 = vmatpush2.msra.mxu0 %v576
        %632 = vmatprep.subr.mxu0 %v573
        %633 = vmatpush2.msra.mxu0 %v572
        %634 = vmatprep.subr.mxu0 %v569
        %635 = vmatpush2.msra.mxu0 %v568
        %636 = vmatprep.subr.mxu0 %v565
        %637 = vmatpush2.msra.mxu0 %v564
        %638 = vmatprep.subr.mxu0 %v561
        %639 = vmatpush2.msra.mxu0 %v560
        %640 = vmatprep.subr.mxu0 %v557
        %641 = vmatpush2.msra.mxu0 %v556
        %642 = vmatprep.subr.mxu0 %v553
        %643 = vmatpush2.msra.mxu0 %v552
        %644 = vmatprep.subr.mxu0 %v549
        %645 = vmatpush2.msra.mxu0 %v548
        %646 = vmatprep.subr.mxu0 %v545
        %647 = vmatpush2.msra.mxu0 %v544
        %648 = vmatprep.subr.mxu0 %v541
        %649 = vmatpush2.msra.mxu0 %v540
        %650 = vmatprep.subr.mxu0 %v537
        %651 = vmatpush2.msra.mxu0 %v536
        %652 = vmatprep.subr.mxu0 %v533
        %653 = vmatpush2.msra.mxu0 %v532
        %654 = vmatprep.subr.mxu0 %v529
        %655 = vmatpush2.msra.mxu0 %v528
        %656 = vmatprep.mubr.f32.mxu0 %v463
        %657 = vmatmul.mubr.f32.gmra.mxu0 %v462
        %v658 = vpop.f32.mrf.mxu0
        %v659 = vadd.f32 0.0, %v658
        %v660 = vpop.f32.mrf.mxu0
        %v661 = vadd.f32 0.0, %v660
        %662 = vdwg.mxu0
        %663 = vmatprep.subr.mxu0 %v527
        %664 = vmatpush1.msra.mxu0 %v526
        %665 = vmatprep.subr.mxu0 %v523
        %666 = vmatpush1.msra.mxu0 %v522
        %667 = vmatprep.subr.mxu0 %v519
        %668 = vmatpush1.msra.mxu0 %v518
        %669 = vmatprep.subr.mxu0 %v515
        %670 = vmatpush1.msra.mxu0 %v514
        %671 = vmatprep.subr.mxu0 %v511
        %672 = vmatpush1.msra.mxu0 %v510
        %673 = vmatprep.subr.mxu0 %v507
        %674 = vmatpush1.msra.mxu0 %v506
        %675 = vmatprep.subr.mxu0 %v503
        %676 = vmatpush1.msra.mxu0 %v502
        %677 = vmatprep.subr.mxu0 %v499
        %678 = vmatpush1.msra.mxu0 %v498
        %679 = vmatprep.subr.mxu0 %v495
        %680 = vmatpush1.msra.mxu0 %v494
        %681 = vmatprep.subr.mxu0 %v491
        %682 = vmatpush1.msra.mxu0 %v490
        %683 = vmatprep.subr.mxu0 %v487
        %684 = vmatpush1.msra.mxu0 %v486
        %685 = vmatprep.subr.mxu0 %v483
        %686 = vmatpush1.msra.mxu0 %v482
        %687 = vmatprep.subr.mxu0 %v479
        %688 = vmatpush1.msra.mxu0 %v478
        %689 = vmatprep.subr.mxu0 %v475
        %690 = vmatpush1.msra.mxu0 %v474
        %691 = vmatprep.subr.mxu0 %v471
        %692 = vmatpush1.msra.mxu0 %v470
        %693 = vmatprep.subr.mxu0 %v467
        %694 = vmatpush1.msra.mxu0 %v466
        %695 = vmatprep.subr.mxu0 %v591
        %696 = vmatpush2.msra.mxu0 %v590
        %697 = vmatprep.subr.mxu0 %v587
        %698 = vmatpush2.msra.mxu0 %v586
        %699 = vmatprep.subr.mxu0 %v583
        %700 = vmatpush2.msra.mxu0 %v582
        %701 = vmatprep.subr.mxu0 %v579
        %702 = vmatpush2.msra.mxu0 %v578
        %703 = vmatprep.subr.mxu0 %v575
        %704 = vmatpush2.msra.mxu0 %v574
        %705 = vmatprep.subr.mxu0 %v571
        %706 = vmatpush2.msra.mxu0 %v570
        %707 = vmatprep.subr.mxu0 %v567
        %708 = vmatpush2.msra.mxu0 %v566
        %709 = vmatprep.subr.mxu0 %v563
        %710 = vmatpush2.msra.mxu0 %v562
        %711 = vmatprep.subr.mxu0 %v559
        %712 = vmatpush2.msra.mxu0 %v558
        %713 = vmatprep.subr.mxu0 %v555
        %714 = vmatpush2.msra.mxu0 %v554
        %715 = vmatprep.subr.mxu0 %v551
        %716 = vmatpush2.msra.mxu0 %v550
        %717 = vmatprep.subr.mxu0 %v547
        %718 = vmatpush2.msra.mxu0 %v546
        %719 = vmatprep.subr.mxu0 %v543
        %720 = vmatpush2.msra.mxu0 %v542
        %721 = vmatprep.subr.mxu0 %v539
        %722 = vmatpush2.msra.mxu0 %v538
        %723 = vmatprep.subr.mxu0 %v535
        %724 = vmatpush2.msra.mxu0 %v534
        %725 = vmatprep.subr.mxu0 %v531
        %726 = vmatpush2.msra.mxu0 %v530
        %727 = vmatprep.mubr.f32.mxu0 %v463
        %728 = vmatmul.mubr.f32.gmra.mxu0 %v462
        %v729 = vpop.f32.mrf.mxu0
        %v730 = vadd.f32 0.0, %v729
        %v731 = vpop.f32.mrf.mxu0
        %v732 = vadd.f32 0.0, %v731
        %733 = vdwg.mxu0
        %734 = vst [vmem:[%s460] sm:$0xff] %v659
        %735 = vst [vmem:[%s460 + $0x8] sm:$0xff] %v661
        %736 = vst [vmem:[%s460 + $0x10] sm:$0xff] %v730
        %737 = vst [vmem:[%s460 + $0x18] sm:$0xff] %v732
        %s738 = smul.u32 4, %s18
        %p739 = scmp.lt.s32.totalorder %s17, 0
        %s740 = scalar_select %p739, %s17, 0
        %p741 = scmp.lt.s32.totalorder %s738, 7
        %s742 = scalar_select %p741, %s738, 7
        %s743 = smul.addr %s740, 8
        %s744 = sadd.s32 %s742, %s743
        %s745 = smul.addr %s744, 8
        %s746 = scalar_lea.vmem %s2, %s745
        // Predicated region
        $region52: #{interpolate.1} parent=46 // pred_check
          %p747 = pneg %p97
        $region53: #{interpolate.1} parent=46 // pred_check_branch
          %749 = sbr.rel (%p747) target = $region55
        $region54: #{interpolate.1} parent=46 // pred_region
          %s750 = smul.u32 4, %s18
        $region55: #{interpolate.1} parent=46 // pred_fallthru
          _
      $region47: #{interpolate.1} parent=5 // pred_fallthru
        _
      %p751 = scmp.le.s32.totalorder 2, %s8
      // Predicated region
      $region56: #{interpolate.1} parent=5 // pred_check
        %p752 = pneg %p751
      $region57: #{interpolate.1} parent=5 // pred_check_branch
        %754 = sbr.rel (%p752) target = $region59
      $region58: #{interpolate.1} parent=5 // pred_region
        %s755 = ssub.s32 %s8, 2
        // Predicated region
        $region60: #{interpolate.1} parent=58 // pred_check
          %p756 = pneg %p103
        $region61: #{interpolate.1} parent=58 // pred_check_branch
          %758 = sbr.rel (%p756) target = $region63
        $region62: #{interpolate.1} parent=58 // pred_region
          %s759 = smul.u32 4, %s20
          %p760 = scmp.lt.s32.totalorder %s19, 0
          %s761 = scalar_select %p760, %s19, 0
          %p762 = scmp.lt.s32.totalorder %s759, 7
          %s763 = scalar_select %p762, %s759, 7
          %s764 = smul.addr %s761, 8
          %s765 = sadd.s32 %s763, %s764
          %s766 = smul.addr %s765, 8
          %s767 = scalar_lea.vmem %s2, %s766
        $region63: #{interpolate.1} parent=58 // pred_fallthru
          _
      $region59: #{interpolate.1} parent=5 // pred_fallthru
        _
    $region6: #{interpolate.1} parent=1 // loop_footer
      %s12 = sadd.s32 1, %s8
    $region7: #{interpolate.1} parent=1 // loop_footer_branch
      %7 = sbr.rel target = $region3
    $region8: #{interpolate.1} parent=1 // loop_exit
      _

</llo_original>
